<compile_context>
chip_gen: v5e
topology: v5e:2x2
jax: 0.10.0
libtpu: 0.0.40
codegen_flags: <defaults>
</compile_context>

<pallas_src>
import math

import jax
import jax.numpy as jnp
from jax.experimental import pallas as pl
from jax.experimental.pallas import tpu as pltpu


def _drop_path_kernel(scale_ref, x_ref, o_ref):
    # scale_ref: (tr, 1) per-row scale (0.0 or 1/keep_prob), same dtype as x
    # x_ref    : (tr, L) sublane/lane-dense feature slab  ->  o_ref: (tr, L)
    o_ref[...] = x_ref[...] * scale_ref[...]


def _per_sample_scale(key, batch, keep_prob, dtype=jnp.float32):
    # floor(keep_prob + U[0,1)) == Bernoulli(keep_prob), exactly like the torch impl.
    u = jax.random.uniform(key, (batch, 1), dtype=jnp.float32)
    mask = jnp.floor(keep_prob + u)
    return (mask / keep_prob).astype(dtype)


def _choose_lanes(m):
    """Pick a lane width L (multiple of 128) and the padded per-sample size Mp."""
    for lanes in (512, 256, 128):
        if m % lanes == 0:
            return lanes, m
    return 128, pl.cdiv(m, 128) * 128  # awkward sizes: pad up to a 128 multiple


def _choose_row_block(rows, bytes_per_row, target_bytes):
    """Row-block size: multiple of 8, ~target_bytes per block, >= 2 grid steps if possible."""
    if rows <= 8:
        return rows  # full-dim block (valid even when < 8)
    tr = min(rows, max(1, target_bytes // bytes_per_row))
    tr = max(8, (tr // 8) * 8)
    if tr >= rows:
        # Whole slab would be a single step: split so pipelining and v7x's
        # 2-TC "parallel" sharding stay active.
        tr = max(8, pl.cdiv(pl.cdiv(rows, 2), 8) * 8)
    return min(tr, rows)


def drop_path_pallas(x, key, drop_prob: float = 0.0, training: bool = False,
                     *, block_bytes: int = 2 * 1024 * 1024, donate_x: bool = False):
    """Stochastic depth: drop the whole residual branch per sample.

    x: (B, ...) any rank >= 1.  Returns an array of the same shape/dtype.
    """
    if drop_prob == 0.0 or not training:
        return x  # identity — same short-circuit as the PyTorch module

    keep_prob = 1.0 - drop_prob
    B = x.shape[0]
    M = math.prod(x.shape[1:])

    lanes, Mp = _choose_lanes(M)
    rows_per_sample = Mp // lanes
    R = B * rows_per_sample

    x2d = x.reshape(B, M)
    if Mp != M:
        x2d = jnp.pad(x2d, ((0, 0), (0, Mp - M)))
    x_rows = x2d.reshape(R, lanes)  # sublane/lane-dense slab

    scale = _per_sample_scale(key, B, keep_prob, x.dtype)      # (B, 1)
    scale_rows = jnp.repeat(scale, rows_per_sample, axis=0)    # (R, 1), O(R)

    tr = _choose_row_block(R, lanes * x.dtype.itemsize, block_bytes)
    grid = (pl.cdiv(R, tr),)  # tail block (if any) is masked by Pallas

    out_rows = pl.pallas_call(
        _drop_path_kernel,
        out_shape=jax.ShapeDtypeStruct((R, lanes), x.dtype),
        grid_spec=pltpu.PrefetchScalarGridSpec(
            num_scalar_prefetch=0,
            grid=grid,
            in_specs=[
                pl.BlockSpec((tr, 1), lambda j: (j, 0)),       # per-row scale
                pl.BlockSpec((tr, lanes), lambda j: (j, 0)),   # feature slab tile
            ],
            out_specs=pl.BlockSpec((tr, lanes), lambda j: (j, 0)),
        ),
        compiler_params=pltpu.CompilerParams(
            # Row axis is independent -> shard across both TCs on v7x; no-op on v5e/v6e.
            dimension_semantics=("parallel",),
        ),
        # In-place multiply when the caller donates x (operand 1 = x_rows).
        input_output_aliases=({1: 0} if donate_x else {}),
    )(scale_rows, x_rows)

    out2d = out_rows.reshape(B, Mp)
    if Mp != M:
        out2d = out2d[:, :M]
    return out2d.reshape(x.shape)


def drop_path_reference(x, key, drop_prob, training):
    if drop_prob == 0.0 or not training:
        return x
    keep_prob = 1.0 - drop_prob
    B = x.shape[0]
    scale = _per_sample_scale(key, B, keep_prob, jnp.float32)
    bshape = (B,) + (1,) * (x.ndim - 1)
    return (x.astype(jnp.float32) * scale.reshape(bshape)).astype(x.dtype)


if __name__ == "__main__":
    drop_prob = 0.25
    keep_prob = 1.0 - drop_prob

    root = jax.random.PRNGKey(0)
    kx, kmask, kx2, kx3 = jax.random.split(root, 4)

    # --- shapes consistent with the module: batch=2, channels=4, spatial=16x16 ---
    x = jax.random.normal(kx, (2, 4, 16, 16), dtype=jnp.float32)

    # training path (stochastic depth active)
    y = jax.block_until_ready(drop_path_pallas(x, kmask, drop_prob, training=True))
    y_ref = drop_path_reference(x, kmask, drop_prob, training=True)
    assert y.shape == x.shape and y.dtype == x.dtype
    assert jnp.allclose(y, y_ref, atol=1e-6, rtol=1e-6), "training-mode mismatch vs reference"

    # each sample is either fully dropped (zeros) or scaled by 1/keep_prob
    for b in range(x.shape[0]):
        kept = bool(jnp.allclose(y[b], x[b] / keep_prob, atol=1e-6, rtol=1e-6))
        dropped = bool(jnp.allclose(y[b], 0.0))
        assert kept or dropped, "invalid per-sample scaling"

    # eval / drop_prob == 0 are identity short-circuits (same as torch)
    assert drop_path_pallas(x, kmask, drop_prob, training=False) is x
    assert drop_path_pallas(x, kmask, 0.0, training=True) is x

    # awkward feature size: M = 3*5*7 = 105 -> padded to 128 lanes internally
    x_awk = jax.random.normal(kx2, (2, 3, 5, 7), dtype=jnp.float32)
    y_awk = jax.block_until_ready(drop_path_pallas(x_awk, kmask, drop_prob, training=True))
    y_awk_ref = drop_path_reference(x_awk, kmask, drop_prob, training=True)
    assert jnp.allclose(y_awk, y_awk_ref, atol=1e-6, rtol=1e-6), "padded-tail path mismatch"

    # multi-step grid (R=32 rows -> 2 grid steps) + native bf16 multiply path
    x_big = jax.random.normal(kx3, (2, 8, 32, 32), dtype=jnp.bfloat16)
    y_big = jax.block_until_ready(drop_path_pallas(x_big, kmask, drop_prob, training=True))
    y_big_ref = drop_path_reference(x_big, kmask, drop_prob, training=True)
    assert jnp.allclose(y_big.astype(jnp.float32), y_big_ref.astype(jnp.float32),
                        atol=5e-2, rtol=5e-2), "bf16 / multi-step grid mismatch"

    print("KERNEL_OK")
</pallas_src>

<mosaic_0001>
module attributes {stable_mosaic.version = 11 : i64} {
  func.func @_drop_path_kernel(%arg0: i32, %arg1: memref<4x1xf32, #tpu.memory_space<vmem>>, %arg2: memref<4x512xf32, #tpu.memory_space<vmem>>, %arg3: memref<4x512xf32, #tpu.memory_space<vmem>>) attributes {dimension_semantics = [#tpu.dimension_semantics<parallel>], iteration_bounds = array<i64: 1>, scalar_prefetch = 0 : i64, scratch_operands = 0 : i64, tpu.core_type = #tpu.core_type<tc>, window_params = [{transform_indices = @transform_0, window_bounds = array<i64: 4, 1>}, {transform_indices = @transform_1, window_bounds = array<i64: 4, 512>}, {transform_indices = @transform_2, window_bounds = array<i64: 4, 512>}]} {
    %c0 = arith.constant 0 : index
    %c0_0 = arith.constant 0 : index
    %0 = vector.load %arg2[%c0, %c0_0] : memref<4x512xf32, #tpu.memory_space<vmem>>, vector<4x512xf32>
    %c0_1 = arith.constant 0 : index
    %c0_2 = arith.constant 0 : index
    %1 = vector.load %arg1[%c0_1, %c0_2] : memref<4x1xf32, #tpu.memory_space<vmem>>, vector<4x1xf32>
    %2 = vector.broadcast %1 : vector<4x1xf32> to vector<4x512xf32>
    %3 = arith.mulf %0, %2 : vector<4x512xf32>
    %c0_3 = arith.constant 0 : index
    %c0_4 = arith.constant 0 : index
    %4 = vector.load %arg3[%c0_3, %c0_4] : memref<4x512xf32, #tpu.memory_space<vmem>>, vector<4x512xf32>
    tpu.vector_store %arg3[%c0_3, %c0_4], %3 {strides = array<i32>} : memref<4x512xf32, #tpu.memory_space<vmem>>, vector<4x512xf32>,
    return
  }
  func.func @transform_0(%arg0: i32) -> (i32, i32) {
    %c0_i32 = arith.constant 0 : i32
    %c0_i32_0 = arith.constant 0 : i32
    return %arg0, %c0_i32 : i32, i32
  }
  func.func @transform_1(%arg0: i32) -> (i32, i32) {
    %c0_i32 = arith.constant 0 : i32
    %c0_i32_0 = arith.constant 0 : i32
    return %arg0, %c0_i32 : i32, i32
  }
  func.func @transform_2(%arg0: i32) -> (i32, i32) {
    %c0_i32 = arith.constant 0 : i32
    %c0_i32_0 = arith.constant 0 : i32
    return %arg0, %c0_i32 : i32, i32
  }
}

</mosaic_0001>

<llo_original>
// kernel: tpu_custom_call.1
$region0: #{tpu_custom_call.1}
  #allocation0 [shape = 'u32[]', space=smem, size = 0x4, offset = 0x4, fixed_abs, tag = 'smem constant byte address 0x4 - core index']
  #allocation1 [shape = 'u32[72,128]{1,0:T(1,128)}', space=vmem, size = 0x9000, scoped, tag = 'internal scratch']
  %s0 = inlined_call_operand.vmem [shape: f32[4,1], index: 0, kind: input, shape index: {}]
  %s1 = inlined_call_operand.hbm [shape: f32[4,512], index: 1, kind: input, shape index: {}]
  %s2 = inlined_call_operand.hbm [shape: f32[4,512], index: 2, kind: output, shape index: {}]
  %s3 = sld [smem:[#allocation0]]
  $region22: #{tpu_custom_call.1} parent=0
    _
  %s5 = ssub.s32 1, %s3
  %s6 = scalar_select 0, %s5, %s3
  $region1: #{tpu_custom_call.1} parent=0
    #allocation2 [shape = 'u8[8192]{0}', space=vmem, size = 0x2000, scoped, tag = 'input window, operand 1, single buffered']
    #allocation3 [shape = 's32[1]{0}', space=sflag, size = 0x4, scoped, tag = 'scoped memory for tpu_custom_call.1']
    #allocation4 [shape = 's32[1]{0}', space=sflag, size = 0x4, scoped, tag = 'scoped memory for tpu_custom_call.1']
    #allocation5 [shape = 'u8[8192]{0}', space=vmem, size = 0x2000, scoped, tag = 'output window, operand 0, single buffered']
    %7 = vsyncpa [#allocation3], 0
    %8 = vsyncpa [#allocation4], 0
    // Predicated region
    $region2: #{tpu_custom_call.1} parent=1 // pred_check
      _
    $region3: #{tpu_custom_call.1} parent=1 // pred_check_branch
      %10 = sbr.rel (0) target = $region5
    $region4: #{tpu_custom_call.1} parent=1 // pred_region
      _
    $region5: #{tpu_custom_call.1} parent=1 // pred_fallthru
      _
    // Predicated region
    $region6: #{tpu_custom_call.1} parent=1 // pred_check
      _
    $region7: #{tpu_custom_call.1} parent=1 // pred_check_branch
      %12 = sbr.rel (0) target = $region9
    $region8: #{tpu_custom_call.1} parent=1 // pred_region
      %14 = vsyncadd [#allocation3], 0
      %s16 = sshll.u32 %s1, 4
      %s17 = int_to_ptr.hbm [resolvable:$true] %s16
      %s18 = sshll.u32 [#allocation2], 4
      %s19 = int_to_ptr.vmem [resolvable:$true] %s18
      %21 = dma.hbm_to_vmem [thread:$0]  %s17, 256, %s19, [#allocation3]
    $region9: #{tpu_custom_call.1} parent=1 // pred_fallthru
      _
    // Predicated region
    $region10: #{tpu_custom_call.1} parent=1 // pred_check
      _
    $region11: #{tpu_custom_call.1} parent=1 // pred_check_branch
      %23 = sbr.rel (0) target = $region13
    $region12: #{tpu_custom_call.1} parent=1 // pred_region
      %25 = dma.done [#allocation3], 256
    $region13: #{tpu_custom_call.1} parent=1 // pred_fallthru
      _
    %v26 = vld [vmem:[#allocation2] sm:$0xff]
    %v27 = vld [vmem:[#allocation2 + $0x8] sm:$0xff]
    %v28 = vld [vmem:[%s0] sm:$0xf]
    %30 = vset.pattern.permute.xlu0 0
    %31 = vperm.xlu0 %30, %v28
    %v32 = vpop.permute.xlu0 %31
    %v34 = vunpack.c.l.s4 839922192
    %v35 = vunpack.c.0.s8 %v34
    %v36 = vperm.slane %v32, %v35
    %v38 = vmul.f32 %v26, %v36
    %v39 = vmul.f32 %v27, %v36
    %40 = vst [vmem:[#allocation5] sm:$0xff] %v38
    %41 = vst [vmem:[#allocation5 + $0x8] sm:$0xff] %v39
    // Predicated region
    $region14: #{tpu_custom_call.1} parent=1 // pred_check
      _
    $region15: #{tpu_custom_call.1} parent=1 // pred_check_branch
      %43 = sbr.rel (0) target = $region17
    $region16: #{tpu_custom_call.1} parent=1 // pred_region
      %45 = vsyncadd [#allocation4], 0
      %s47 = sshll.u32 [#allocation5], 4
      %s48 = int_to_ptr.vmem [resolvable:$true] %s47
      %s49 = sshll.u32 %s2, 4
      %s50 = int_to_ptr.hbm [resolvable:$true] %s49
      %52 = dma.vmem_to_hbm [thread:$0]  %s48, 256, %s50, [#allocation4]
    $region17: #{tpu_custom_call.1} parent=1 // pred_fallthru
      _
    // Predicated region
    $region18: #{tpu_custom_call.1} parent=1 // pred_check
      _
    $region19: #{tpu_custom_call.1} parent=1 // pred_check_branch
      %54 = sbr.rel (0) target = $region21
    $region20: #{tpu_custom_call.1} parent=1 // pred_region
      %56 = dma.done [#allocation4], 256
    $region21: #{tpu_custom_call.1} parent=1 // pred_fallthru
      _
    %57 = vsyncpa [#allocation3], 1
    %58 = vsyncpa [#allocation4], 1

</llo_original>
